<compile_context>
chip_gen: v6e
topology: v6e:2x2x1
jax: 0.10.0
libtpu: 0.0.40
codegen_flags: <defaults>
</compile_context>

<pallas_src>
import functools

import jax
import jax.numpy as jnp
from jax import lax
from jax.experimental import pallas as pl
from jax.experimental.pallas import tpu as pltpu


# ----------------------------------------------------------------------------
# Pallas kernel
# ----------------------------------------------------------------------------
def _mask_kernel(bounds_ref, x_ref, o_ref, *, n_freq_mask, batch, mask_value):
    """One grid step == (batch element b, time tile tj).

    bounds_ref: (2 * (n_freq_mask + 1) * batch,) int32 in SMEM, flattened from
        (n_masks, 2, batch): masks 0..n_freq_mask-1 are frequency bands, mask
        n_freq_mask is the time band; entry 0 is start, entry 1 is end.
    x_ref / o_ref: (1, F, tt) VMEM tiles (o aliases x in HBM).  The last time
        tile may be partial: OOB lanes load stale data but their stores are
        masked by Pallas, and nothing here reduces over the tile.
    """
    b = pl.program_id(0)
    tj = pl.program_id(1)
    _, n_f, tt = x_ref.shape

    def bound(m, which):                              # which: 0=start, 1=end
        return bounds_ref[(m * 2 + which) * batch + b]

    # Time-band mask from a lane-only iota (absolute T index via tile offset).
    tidx = lax.broadcasted_iota(jnp.int32, (1, tt), 1) + tj * tt
    ts = bound(n_freq_mask, 0)
    te = bound(n_freq_mask, 1)
    mask = (tidx >= ts) & (tidx < te)                 # (1, tt)

    # Frequency-band masks from a sublane-only iota, OR-ed together.
    if n_freq_mask > 0:
        fidx = lax.broadcasted_iota(jnp.int32, (n_f, 1), 0)
        fmask = (fidx >= bound(0, 0)) & (fidx < bound(0, 1))
        for m in range(1, n_freq_mask):
            fmask = fmask | ((fidx >= bound(m, 0)) & (fidx < bound(m, 1)))
        mask = fmask | mask                           # (F, tt) via broadcast

    x = x_ref[...]
    o_ref[...] = jnp.where(mask[None], jnp.asarray(mask_value, x.dtype), x)


# ----------------------------------------------------------------------------
# Wrapper: tiling + pallas_call
# ----------------------------------------------------------------------------
def _choose_time_tile(n_freq, n_time, batch, itemsize,
                      max_lane_tile=2048,
                      vmem_budget_bytes=10 * 1024 * 1024):
    """Lane-dense (multiple of 128) T tile.

    Capped at max_lane_tile lanes (HBM roofline is already reached well below
    that) and so that the double-buffered in+out footprint 4*F*tt*itemsize
    stays under a conservative VMEM budget.  For batch == 1, the tile is
    shrunk (when possible) so the T axis yields >= 2 parallel grid units for
    v7x's two TensorCores.
    """
    tt = min(((n_time + 127) // 128) * 128, max_lane_tile)
    cap = (vmem_budget_bytes // (4 * max(n_freq, 1) * itemsize)) // 128 * 128
    tt = max(128, min(tt, max(cap, 128)))
    if batch == 1 and n_time > 128:
        tt = max(128, min(tt, ((n_time - 1) // 128) * 128))
    return tt


def _apply_masks_pallas(x, bounds, n_freq_mask, mask_value=0.0):
    """x: (B, F, T).  bounds: flat int32 (2*(n_freq_mask+1)*B,)."""
    B, F, T = x.shape
    itemsize = jnp.dtype(x.dtype).itemsize
    tt = _choose_time_tile(F, T, B, itemsize)
    n_t_tiles = pl.cdiv(T, tt)

    # Double-buffered input + output tiles plus slack for iota/mask temporaries.
    footprint = 4 * F * tt * itemsize
    vmem_limit = min(footprint + (4 << 20), 64 << 20)

    grid_spec = pltpu.PrefetchScalarGridSpec(
        num_scalar_prefetch=1,
        grid=(B, n_t_tiles),
        in_specs=[pl.BlockSpec((1, F, tt), lambda b, t, *_: (b, 0, t))],
        out_specs=pl.BlockSpec((1, F, tt), lambda b, t, *_: (b, 0, t)),
    )
    return pl.pallas_call(
        functools.partial(_mask_kernel, n_freq_mask=n_freq_mask, batch=B,
                          mask_value=mask_value),
        out_shape=jax.ShapeDtypeStruct((B, F, T), x.dtype),
        grid_spec=grid_spec,
        # x is overall input index 1 (after the packed scalar-prefetch array);
        # alias it with the output => logically an in-place masked_fill_.
        input_output_aliases={1: 0},
        compiler_params=pltpu.CompilerParams(
            dimension_semantics=("parallel", "parallel"),
            vmem_limit_bytes=vmem_limit),
    )(bounds, x)


# ----------------------------------------------------------------------------
# Random bound sampling (mirrors torchaudio mask_along_axis_iid semantics)
# ----------------------------------------------------------------------------
def _sample_bounds(key, batch, size, mask_param):
    """start = trunc(rand*(size - rand*param)), end = start + trunc(rand*param)
    — exactly mask_along_axis_iid with the size-1 channel dim folded away."""
    k1, k2 = jax.random.split(key)
    value = jax.random.uniform(k1, (batch,)) * mask_param
    min_value = jax.random.uniform(k2, (batch,)) * (size - value)
    start = min_value.astype(jnp.int32)      # .long() truncates toward 0
    end = start + value.astype(jnp.int32)
    return start, end


def _sample_all_bounds(key, batch, n_freq, n_time, n_freq_mask,
                       max_freq_mask_len, max_time_mask_len):
    """Returns [(fs, fe)] * n_freq_mask + [(ts, te)]."""
    keys = jax.random.split(key, n_freq_mask + 1)
    bounds = []
    for i in range(n_freq_mask):
        bounds.append(_sample_bounds(keys[i], batch, n_freq, max_freq_mask_len))
    bounds.append(_sample_bounds(keys[n_freq_mask], batch, n_time,
                                 max_time_mask_len))
    return bounds


def _pack_bounds(bounds):
    """Pack [(start, end)]*n_masks into one flat int32 array of shape
    (n_masks * 2 * B,), layout (mask, start/end, batch)."""
    return jnp.stack(
        [jnp.stack([s.astype(jnp.int32), e.astype(jnp.int32)])
         for (s, e) in bounds]).reshape(-1)


def _apply_masks_ref(x, bounds, n_freq_mask, mask_value=0.0):
    """Pure-JAX (XLA) masking — used for tiny inputs and for verification."""
    B, F, T = x.shape
    fidx = jnp.arange(F)[None, :, None]
    tidx = jnp.arange(T)[None, None, :]
    mask = jnp.zeros((B, F, T), jnp.bool_)
    for i, (s, e) in enumerate(bounds):
        idx = tidx if i == n_freq_mask else fidx
        mask = mask | ((idx >= s[:, None, None]) & (idx < e[:, None, None]))
    return jnp.where(mask, jnp.asarray(mask_value, x.dtype), x)


# ----------------------------------------------------------------------------
# Public entry point: SpectrumAug.forward equivalent
# ----------------------------------------------------------------------------
def spectrum_aug(spectrum, key, *, max_freq_mask_len=27, max_time_mask_len=100,
                 n_freq_mask=1, mask_value=0.0, training=True, use_pallas=None):
    """JAX/Pallas equivalent of SpectrumAug.forward.  spectrum: (B, F, T)."""
    if not training:
        return spectrum
    B, F, T = spectrum.shape
    bounds = _sample_all_bounds(key, B, F, T, n_freq_mask,
                                max_freq_mask_len, max_time_mask_len)
    if use_pallas is None:
        # Tiny inputs: pallas_call launch + per-step overhead dominates; let
        # XLA fuse a plain elementwise where instead.
        use_pallas = spectrum.size * jnp.dtype(spectrum.dtype).itemsize >= (1 << 20)
    # TODO(synk): torch's trailing .squeeze() would also drop the batch dim for
    # B == 1; we keep (B, F, T) unconditionally.
    if not use_pallas:
        return _apply_masks_ref(spectrum, bounds, n_freq_mask, mask_value)
    packed = _pack_bounds(bounds)
    return _apply_masks_pallas(spectrum, packed, n_freq_mask, mask_value)


# ----------------------------------------------------------------------------
# Demo / self-check
# ----------------------------------------------------------------------------
if __name__ == "__main__":
    key = jax.random.PRNGKey(0)
    k_data1, k_aug1, k_data2, k_aug2 = jax.random.split(key, 4)

    max_freq_mask_len, max_time_mask_len = 27, 100

    # Case 1: small shapes consistent with the module (n_mels=80 fbank, short
    # utterance), two frequency masks; partial edge time tile (T=200, tt=256).
    B1, F1, T1, nfm1 = 2, 80, 200, 2
    spec1 = jax.random.normal(k_data1, (B1, F1, T1), jnp.float32)
    out1 = spectrum_aug(spec1, k_aug1,
                        max_freq_mask_len=max_freq_mask_len,
                        max_time_mask_len=max_time_mask_len,
                        n_freq_mask=nfm1, training=True, use_pallas=True)
    out1 = jax.block_until_ready(out1)
    ref1 = _apply_masks_ref(
        spec1,
        _sample_all_bounds(k_aug1, B1, F1, T1, nfm1,
                           max_freq_mask_len, max_time_mask_len),
        nfm1)
    assert out1.shape == (B1, F1, T1)
    assert jnp.allclose(out1, ref1), "Pallas output mismatch vs reference (1)"

    # Case 2: batch of 1 (exercises the forced >=2 T-tile split for v7x) with
    # a partial last tile (T=300 -> tiles of 256 + 44), single freq mask.
    B2, F2, T2, nfm2 = 1, 80, 300, 1
    spec2 = jax.random.normal(k_data2, (B2, F2, T2), jnp.float32)
    out2 = spectrum_aug(spec2, k_aug2,
                        max_freq_mask_len=max_freq_mask_len,
                        max_time_mask_len=max_time_mask_len,
                        n_freq_mask=nfm2, training=True, use_pallas=True)
    out2 = jax.block_until_ready(out2)
    ref2 = _apply_masks_ref(
        spec2,
        _sample_all_bounds(k_aug2, B2, F2, T2, nfm2,
                           max_freq_mask_len, max_time_mask_len),
        nfm2)
    assert out2.shape == (B2, F2, T2)
    assert jnp.allclose(out2, ref2), "Pallas output mismatch vs reference (2)"

    # Eval mode is identity.
    assert spectrum_aug(spec1, k_aug1, training=False) is spec1

    print("KERNEL_OK")
</pallas_src>

<mosaic_0001>
module attributes {stable_mosaic.version = 11 : i64} {
  func.func @_mask_kernel(%arg0: i32, %arg1: i32, %arg2: memref<12xi32, #tpu.memory_space<smem>>, %arg3: memref<1x80x256xf32, #tpu.memory_space<vmem>>, %arg4: memref<1x80x256xf32, #tpu.memory_space<vmem>>) attributes {dimension_semantics = [#tpu.dimension_semantics<parallel>, #tpu.dimension_semantics<parallel>], iteration_bounds = array<i64: 2, 1>, scalar_prefetch = 1 : i64, scratch_operands = 0 : i64, tpu.core_type = #tpu.core_type<tc>, window_params = [{transform_indices = @transform_0, window_bounds = array<i64: 1, 80, 256>}, {transform_indices = @transform_1, window_bounds = array<i64: 1, 80, 256>}]} {
    %0 = tpu.iota {dimensions = array<i32: 1>} : vector<1x256xi32>
    %c256_i32 = arith.constant 256 : i32
    %1 = arith.muli %arg1, %c256_i32 : i32
    %2 = vector.broadcast %1 : i32 to vector<1x256xi32>
    %3 = arith.addi %0, %2 : vector<1x256xi32>
    %c8_i32 = arith.constant 8 : i32
    %4 = arith.addi %c8_i32, %arg0 : i32
    %5 = arith.index_cast %4 : i32 to index
    %6 = memref.load %arg2[%5] : memref<12xi32, #tpu.memory_space<smem>>
    %c10_i32 = arith.constant 10 : i32
    %7 = arith.addi %c10_i32, %arg0 : i32
    %8 = arith.index_cast %7 : i32 to index
    %9 = memref.load %arg2[%8] : memref<12xi32, #tpu.memory_space<smem>>
    %10 = vector.broadcast %6 : i32 to vector<1x256xi32>
    %11 = arith.cmpi sge, %3, %10 : vector<1x256xi32>
    %12 = vector.broadcast %9 : i32 to vector<1x256xi32>
    %13 = arith.cmpi slt, %3, %12 : vector<1x256xi32>
    %14 = arith.andi %11, %13 : vector<1x256xi1>
    %15 = tpu.iota {dimensions = array<i32: 0>} : vector<80x1xi32>
    %c0_i32 = arith.constant 0 : i32
    %16 = arith.addi %c0_i32, %arg0 : i32
    %17 = arith.index_cast %16 : i32 to index
    %18 = memref.load %arg2[%17] : memref<12xi32, #tpu.memory_space<smem>>
    %19 = vector.broadcast %18 : i32 to vector<80x1xi32>
    %20 = arith.cmpi sge, %15, %19 : vector<80x1xi32>
    %c2_i32 = arith.constant 2 : i32
    %21 = arith.addi %c2_i32, %arg0 : i32
    %22 = arith.index_cast %21 : i32 to index
    %23 = memref.load %arg2[%22] : memref<12xi32, #tpu.memory_space<smem>>
    %24 = vector.broadcast %23 : i32 to vector<80x1xi32>
    %25 = arith.cmpi slt, %15, %24 : vector<80x1xi32>
    %26 = arith.andi %20, %25 : vector<80x1xi1>
    %c4_i32 = arith.constant 4 : i32
    %27 = arith.addi %c4_i32, %arg0 : i32
    %28 = arith.index_cast %27 : i32 to index
    %29 = memref.load %arg2[%28] : memref<12xi32, #tpu.memory_space<smem>>
    %30 = vector.broadcast %29 : i32 to vector<80x1xi32>
    %31 = arith.cmpi sge, %15, %30 : vector<80x1xi32>
    %c6_i32 = arith.constant 6 : i32
    %32 = arith.addi %c6_i32, %arg0 : i32
    %33 = arith.index_cast %32 : i32 to index
    %34 = memref.load %arg2[%33] : memref<12xi32, #tpu.memory_space<smem>>
    %35 = vector.broadcast %34 : i32 to vector<80x1xi32>
    %36 = arith.cmpi slt, %15, %35 : vector<80x1xi32>
    %37 = arith.andi %31, %36 : vector<80x1xi1>
    %38 = arith.ori %26, %37 : vector<80x1xi1>
    %39 = vector.broadcast %38 : vector<80x1xi1> to vector<80x256xi1>
    %40 = vector.broadcast %14 : vector<1x256xi1> to vector<80x256xi1>
    %41 = arith.ori %39, %40 : vector<80x256xi1>
    %c0 = arith.constant 0 : index
    %c0_0 = arith.constant 0 : index
    %c0_1 = arith.constant 0 : index
    %42 = vector.load %arg3[%c0, %c0_0, %c0_1] : memref<1x80x256xf32, #tpu.memory_space<vmem>>, vector<1x80x256xf32>
    %43 = vector.shape_cast %41 : vector<80x256xi1> to vector<1x80x256xi1>
    %cst = arith.constant 0.000000e+00 : f32
    %44 = vector.broadcast %cst : f32 to vector<1x80x256xf32>
    %45 = arith.select %43, %44, %42 : vector<1x80x256xi1>, vector<1x80x256xf32>
    %c0_2 = arith.constant 0 : index
    %c0_3 = arith.constant 0 : index
    %c0_4 = arith.constant 0 : index
    %46 = vector.load %arg4[%c0_2, %c0_3, %c0_4] : memref<1x80x256xf32, #tpu.memory_space<vmem>>, vector<1x80x256xf32>
    tpu.vector_store %arg4[%c0_2, %c0_3, %c0_4], %45 {strides = array<i32>} : memref<1x80x256xf32, #tpu.memory_space<vmem>>, vector<1x80x256xf32>,
    return
  }
  func.func @transform_0(%arg0: i32, %arg1: i32, %arg2: memref<12xi32, #tpu.memory_space<smem>>) -> (i32, i32, i32) {
    %c0_i32 = arith.constant 0 : i32
    %c0_i32_0 = arith.constant 0 : i32
    return %arg0, %c0_i32, %arg1 : i32, i32, i32
  }
  func.func @transform_1(%arg0: i32, %arg1: i32, %arg2: memref<12xi32, #tpu.memory_space<smem>>) -> (i32, i32, i32) {
    %c0_i32 = arith.constant 0 : i32
    %c0_i32_0 = arith.constant 0 : i32
    return %arg0, %c0_i32, %arg1 : i32, i32, i32
  }
}

</mosaic_0001>

<llo_original>
// kernel: tpu_custom_call.1
$region0: #{tpu_custom_call.1}
  #allocation0 [shape = 'u32[]', space=smem, size = 0x4, offset = 0x4, fixed_abs, tag = 'smem constant byte address 0x4 - core index']
  #allocation1 [shape = 'u32[144,128]{1,0:T(1,128)}', space=vmem, size = 0x12000, scoped, tag = 'internal scratch']
  #allocation2 [shape = 's32[1]{0}', space=sflag, size = 0x4, scoped, tag = 'scoped memory for tpu_custom_call.1']
  #allocation3 [shape = 'u8[512]{0}', space=smem, size = 0x200, scoped, tag = 'prefetched SMEM operand 0']
  %s0 = inlined_call_operand.vmem [shape: s32[12], index: 0, kind: input, shape index: {}]
  %s1 = inlined_call_operand.hbm [shape: f32[2,80,200], index: 1, kind: input, shape index: {}, may-alias: {1,2}]
  %s2 = inlined_call_operand.hbm [shape: f32[2,80,200], index: 2, kind: output, shape index: {}, may-alias: {1,2}]
  %s3 = sld [smem:[#allocation0]]
  $region41: #{tpu_custom_call.1} parent=0
    _
  %s5 = ssub.s32 1, %s3
  %s6 = scalar_select 0, %s5, %s3
  %s7 = sshll.u32 %s0, 4
  %s8 = int_to_ptr.vmem [resolvable:$true] %s7
  %10 = dma.vmem_to_smem %s8, 16, [#allocation3], [#allocation2]
  %11 = dma.done [#allocation2], 16
  %12 = sfence
  $region1: #{tpu_custom_call.1} parent=0
    #allocation4 [shape = 'u8[163840]{0}', space=vmem, size = 0x28000, scoped, tag = 'input window, operand 1']
    #allocation5 [shape = 's32[2]{0}', space=sflag, size = 0x8, scoped, tag = 'scoped memory for tpu_custom_call.1']
    #allocation6 [shape = 's32[2]{0}', space=sflag, size = 0x8, scoped, tag = 'scoped memory for tpu_custom_call.1']
    #allocation7 [shape = 'u8[163840]{0}', space=vmem, size = 0x28000, scoped, tag = 'output window, operand 0']
    %13 = vsyncpa [#allocation5], 0
    %s14 = scalar_lea.sflag [#allocation5], 1
    %15 = vsyncpa %s14, 0
    %16 = vsyncpa [#allocation6], 0
    %s17 = scalar_lea.sflag [#allocation6], 1
    %18 = vsyncpa %s17, 0
    loop: start=0, step=1, limit=4
    $region2: #{tpu_custom_call.1} parent=1 // loop_pre_header
      _
    $region3: #{tpu_custom_call.1} parent=1 // loop_header
      %s20 = sphi 0, %s24
      %p21 = scmp.ge.s32.totalorder %s20, 4
      %s27 = sphi 0, %s39
      %s28 = sphi 0, %s35
      %s29 = sphi 0, %s27
      %s30 = sphi 0, %s28
      %s31 = sphi 0, %s29
      %s32 = sphi 0, %s30
      %s44 = sphi 0, %s46
      %s47 = sphi 0, %s44
      %s48 = sphi 0, %s47
      %s64 = sphi 0, %s48
      %s72 = sphi 0, %s74
      %s75 = sphi 0, %s72
      %s76 = sphi 0, %s75
      %s92 = sphi 0, %s76
    $region4: #{tpu_custom_call.1} parent=1 // loop_header_branch
      %23 = sbr.rel (%p21) target = $region8
    $region5: #{tpu_custom_call.1} parent=1 // loop_body
      %s25 = ssub.s32 %s20, 1
      %s26 = ssub.s32 %s20, 2
      %s33 = sadd.s32 1, %s28
      %p34 = scmp.ge.s32.totalorder %s33, 1
      %s35 = scalar_select %p34, 0, %s33
      %s36 = sadd.s32 1, %s27
      %s37 = scalar_select %p34, %s36, %s27
      %p38 = scmp.ge.s32.totalorder %s37, 2
      %s39 = scalar_select %p38, 0, %s37
      %s40 = ssub.s32 %s27, %s39
      %s41 = ssub.s32 %s28, %s35
      %s42 = sor.u32 %s40, %s41
      %p43 = scmp.eq.s32.totalorder %s42, 0
      %s45 = sadd.s32 %s44, 1
      %s46 = scalar_select %p43, %s44, %s45
      %p49 = pneg %p43
      %p50 = scmp.eq.s32.totalorder %s20, 1
      %p51 = por %p49, %p50
      %p52 = scmp.ne.s32.totalorder %s44, %s47
      %p53 = scmp.eq.s32.totalorder %s20, 0
      %p54 = por %p52, %p53
      %p55 = scmp.ne.s32.totalorder %s44, %s47
      %p56 = scmp.eq.s32.totalorder %s25, 1
      %p57 = por %p55, %p56
      %p58 = scmp.ne.s32.totalorder %s47, %s48
      %p59 = scmp.eq.s32.totalorder %s25, 0
      %p60 = por %p58, %p59
      %p61 = scmp.ne.s32.totalorder %s47, %s48
      %p62 = scmp.eq.s32.totalorder %s26, 1
      %p63 = por %p61, %p62
      %p65 = scmp.ne.s32.totalorder %s48, %s64
      %p66 = scmp.eq.s32.totalorder %s26, 0
      %p67 = por %p65, %p66
      %s68 = ssub.s32 %s27, %s39
      %s69 = ssub.s32 %s28, %s35
      %s70 = sor.u32 %s68, %s69
      %p71 = scmp.eq.s32.totalorder %s70, 0
      %s73 = sadd.s32 %s72, 1
      %s74 = scalar_select %p71, %s72, %s73
      %p77 = pneg %p71
      %p78 = scmp.eq.s32.totalorder %s20, 1
      %p79 = por %p77, %p78
      %p80 = scmp.ne.s32.totalorder %s72, %s75
      %p81 = scmp.eq.s32.totalorder %s20, 0
      %p82 = por %p80, %p81
      %p83 = scmp.ne.s32.totalorder %s72, %s75
      %p84 = scmp.eq.s32.totalorder %s25, 1
      %p85 = por %p83, %p84
      %p86 = scmp.ne.s32.totalorder %s75, %s76
      %p87 = scmp.eq.s32.totalorder %s25, 0
      %p88 = por %p86, %p87
      %p89 = scmp.ne.s32.totalorder %s75, %s76
      %p90 = scmp.eq.s32.totalorder %s26, 1
      %p91 = por %p89, %p90
      %p93 = scmp.ne.s32.totalorder %s76, %s92
      %p94 = scmp.eq.s32.totalorder %s26, 0
      %p95 = por %p93, %p94
      %p96 = scmp.le.s32.totalorder 1, %s20
      %p97 = scmp.lt.s32.totalorder %s20, 3
      %p98 = pnand %p96, %p97
      %p99 = pneg %p98
      // Predicated region
      $region9: #{tpu_custom_call.1} parent=5 // pred_check
        _
      $region10: #{tpu_custom_call.1} parent=5 // pred_check_branch
        %101 = sbr.rel (%p98) target = $region12
      $region11: #{tpu_custom_call.1} parent=5 // pred_region
        %s102 = ssub.s32 %s20, 1
      $region12: #{tpu_custom_call.1} parent=5 // pred_fallthru
        _
      %p103 = scmp.lt.s32.totalorder %s20, 2
      // Predicated region
      $region13: #{tpu_custom_call.1} parent=5 // pred_check
        %p104 = pneg %p103
      $region14: #{tpu_custom_call.1} parent=5 // pred_check_branch
        %106 = sbr.rel (%p104) target = $region16
      $region15: #{tpu_custom_call.1} parent=5 // pred_region
        // Predicated region
        $region17: #{tpu_custom_call.1} parent=15 // pred_check
          %p107 = pneg %p54
        $region18: #{tpu_custom_call.1} parent=15 // pred_check_branch
          %109 = sbr.rel (%p107) target = $region20
        $region19: #{tpu_custom_call.1} parent=15 // pred_region
          %s110 = sand.u32 %s44, 1
          %s111 = scalar_lea.sflag [#allocation5], %s110
          %s112 = sand.u32 %s44, 1
          %s113 = smul.addr %s112, 160
          %s114 = scalar_lea.vmem [#allocation4], %s113
          %s115 = smul.u32 2, %s28
          %s117 = ssub.s32 2560, 2560
          %118 = vsyncadd %s111, %s117
          %s119 = smul.addr %s27, 20
          %s120 = sadd.s32 %s115, %s119
          %s121 = smul.addr %s120, 128
          %s122 = scalar_lea.hbm %s1, %s121
          %s123 = sshll.u32 %s114, 4
          %s124 = int_to_ptr.vmem [resolvable:$true] %s123
          %129 = dma.hbm_to_vmem [thread:$0]  %s122, 2560, %s124, %s111, 256, 256, 16
        $region20: #{tpu_custom_call.1} parent=15 // pred_fallthru
          _
      $region16: #{tpu_custom_call.1} parent=5 // pred_fallthru
        _
      %p130 = scmp.le.s32.totalorder 1, %s20
      %p131 = scmp.lt.s32.totalorder %s20, 3
      %p132 = pnand %p130, %p131
      %p133 = pneg %p132
      // Predicated region
      $region21: #{tpu_custom_call.1} parent=5 // pred_check
        _
      $region22: #{tpu_custom_call.1} parent=5 // pred_check_branch
        %135 = sbr.rel (%p132) target = $region24
      $region23: #{tpu_custom_call.1} parent=5 // pred_region
        %s136 = ssub.s32 %s20, 1
        %s137 = sand.u32 %s47, 1
        %s138 = scalar_lea.sflag [#allocation5], %s137
        %s139 = sand.u32 %s47, 1
        %s140 = smul.addr %s139, 160
        %s141 = scalar_lea.vmem [#allocation4], %s140
        // Predicated region
        $region25: #{tpu_custom_call.1} parent=23 // pred_check
          %p142 = pneg %p60
        $region26: #{tpu_custom_call.1} parent=23 // pred_check_branch
          %144 = sbr.rel (%p142) target = $region28
        $region27: #{tpu_custom_call.1} parent=23 // pred_region
          %145 = dma.done %s138, 2560
        $region28: #{tpu_custom_call.1} parent=23 // pred_fallthru
          _
        %s146 = sand.u32 %s47, 1
        %s147 = scalar_lea.sflag [#allocation5], %s146
        %s148 = sand.u32 %s47, 1
        %s149 = smul.addr %s148, 160
        %s150 = scalar_lea.vmem [#allocation4], %s149
        %p151 = pneg %p60
        %p152 = pneg %p57
        %p153 = pneg %p88
        %p154 = pneg %p85
        %s155 = sand.u32 %s75, 1
        %s156 = scalar_lea.sflag [#allocation6], %s155
        %s157 = sand.u32 %s75, 1
        %s158 = smul.addr %s157, 160
        %s159 = scalar_lea.vmem [#allocation7], %s158
        %s160 = smul.u32 2, %s30
        %s161 = smul.u32 2, %s30
        %v162 = vlaneseq
        %v163 = vand.u32 %v162, 127
        %v164 = vadd.s32 %v163, 128
        %s165 = smul.u32 %s30, 256
        %v166 = vstv %s165
        %v167 = vadd.s32 %v163, %v166
        %v168 = vadd.s32 %v164, %v166
        %s169 = sadd.s32 %s29, 8
        %s170 = sld [smem:[#allocation3 + %s169]]
        %s171 = sadd.s32 %s29, 10
        %s172 = sld [smem:[#allocation3 + %s171]]
        %v173 = vstv %s170
        %vm174 = vcmp.ge.s32.totalorder %v167, %v173
        %vm175 = vcmp.ge.s32.totalorder %v168, %v173
        %v176 = vstv %s172
        %vm177 = vcmp.lt.s32.totalorder %v167, %v176
        %vm178 = vcmp.lt.s32.totalorder %v168, %v176
        %vm179 = vmand %vm174, %vm177
        %vm180 = vmand %vm175, %vm178
        %v181 = vlaneseq
        %v182 = vshrl.u32 %v181, 7
        %v183 = vadd.s32 %v182, 8
        %v184 = vadd.s32 %v182, 16
        %v185 = vadd.s32 %v182, 24
        %v186 = vadd.s32 %v182, 32
        %v187 = vadd.s32 %v182, 40
        %v188 = vadd.s32 %v182, 48
        %v189 = vadd.s32 %v182, 56
        %v190 = vadd.s32 %v182, 64
        %v191 = vadd.s32 %v182, 72
        %s192 = sld [smem:[#allocation3 + %s29]]
        %v193 = vstv %s192
        %vm194 = vcmp.ge.s32.totalorder %v182, %v193
        %vm195 = vcmp.ge.s32.totalorder %v183, %v193
        %vm196 = vcmp.ge.s32.totalorder %v184, %v193
        %vm197 = vcmp.ge.s32.totalorder %v185, %v193
        %vm198 = vcmp.ge.s32.totalorder %v186, %v193
        %vm199 = vcmp.ge.s32.totalorder %v187, %v193
        %vm200 = vcmp.ge.s32.totalorder %v188, %v193
        %vm201 = vcmp.ge.s32.totalorder %v189, %v193
        %vm202 = vcmp.ge.s32.totalorder %v190, %v193
        %vm203 = vcmp.ge.s32.totalorder %v191, %v193
        %s204 = sadd.s32 %s29, 2
        %s205 = sld [smem:[#allocation3 + %s204]]
        %v206 = vstv %s205
        %vm207 = vcmp.lt.s32.totalorder %v182, %v206
        %vm208 = vcmp.lt.s32.totalorder %v183, %v206
        %vm209 = vcmp.lt.s32.totalorder %v184, %v206
        %vm210 = vcmp.lt.s32.totalorder %v185, %v206
        %vm211 = vcmp.lt.s32.totalorder %v186, %v206
        %vm212 = vcmp.lt.s32.totalorder %v187, %v206
        %vm213 = vcmp.lt.s32.totalorder %v188, %v206
        %vm214 = vcmp.lt.s32.totalorder %v189, %v206
        %vm215 = vcmp.lt.s32.totalorder %v190, %v206
        %vm216 = vcmp.lt.s32.totalorder %v191, %v206
        %vm217 = vmand %vm194, %vm207
        %vm218 = vmand %vm195, %vm208
        %vm219 = vmand %vm196, %vm209
        %vm220 = vmand %vm197, %vm210
        %vm221 = vmand %vm198, %vm211
        %vm222 = vmand %vm199, %vm212
        %vm223 = vmand %vm200, %vm213
        %vm224 = vmand %vm201, %vm214
        %vm225 = vmand %vm202, %vm215
        %vm226 = vmand %vm203, %vm216
        %s227 = sadd.s32 %s29, 4
        %s228 = sld [smem:[#allocation3 + %s227]]
        %v229 = vstv %s228
        %vm230 = vcmp.ge.s32.totalorder %v182, %v229
        %vm231 = vcmp.ge.s32.totalorder %v183, %v229
        %vm232 = vcmp.ge.s32.totalorder %v184, %v229
        %vm233 = vcmp.ge.s32.totalorder %v185, %v229
        %vm234 = vcmp.ge.s32.totalorder %v186, %v229
        %vm235 = vcmp.ge.s32.totalorder %v187, %v229
        %vm236 = vcmp.ge.s32.totalorder %v188, %v229
        %vm237 = vcmp.ge.s32.totalorder %v189, %v229
        %vm238 = vcmp.ge.s32.totalorder %v190, %v229
        %vm239 = vcmp.ge.s32.totalorder %v191, %v229
        %s240 = sadd.s32 %s29, 6
        %s241 = sld [smem:[#allocation3 + %s240]]
        %v242 = vstv %s241
        %vm243 = vcmp.lt.s32.totalorder %v182, %v242
        %vm244 = vcmp.lt.s32.totalorder %v183, %v242
        %vm245 = vcmp.lt.s32.totalorder %v184, %v242
        %vm246 = vcmp.lt.s32.totalorder %v185, %v242
        %vm247 = vcmp.lt.s32.totalorder %v186, %v242
        %vm248 = vcmp.lt.s32.totalorder %v187, %v242
        %vm249 = vcmp.lt.s32.totalorder %v188, %v242
        %vm250 = vcmp.lt.s32.totalorder %v189, %v242
        %vm251 = vcmp.lt.s32.totalorder %v190, %v242
        %vm252 = vcmp.lt.s32.totalorder %v191, %v242
        %vm253 = vmand %vm230, %vm243
        %vm254 = vmand %vm231, %vm244
        %vm255 = vmand %vm232, %vm245
        %vm256 = vmand %vm233, %vm246
        %vm257 = vmand %vm234, %vm247
        %vm258 = vmand %vm235, %vm248
        %vm259 = vmand %vm236, %vm249
        %vm260 = vmand %vm237, %vm250
        %vm261 = vmand %vm238, %vm251
        %vm262 = vmand %vm239, %vm252
        %vm263 = vmor %vm217, %vm253
        %vm264 = vmor %vm218, %vm254
        %vm265 = vmor %vm219, %vm255
        %vm266 = vmor %vm220, %vm256
        %vm267 = vmor %vm221, %vm257
        %vm268 = vmor %vm222, %vm258
        %vm269 = vmor %vm223, %vm259
        %vm270 = vmor %vm224, %vm260
        %vm271 = vmor %vm225, %vm261
        %vm272 = vmor %vm226, %vm262
        %v273 = vsel %vm263, 1, 0
        %v274 = vsel %vm264, 1, 0
        %v275 = vsel %vm265, 1, 0
        %v276 = vsel %vm266, 1, 0
        %v277 = vsel %vm267, 1, 0
        %v278 = vsel %vm268, 1, 0
        %v279 = vsel %vm269, 1, 0
        %v280 = vsel %vm270, 1, 0
        %v281 = vsel %vm271, 1, 0
        %v282 = vsel %vm272, 1, 0
        %vm283 = vcmp.eq.s32.totalorder %v273, 1
        %vm284 = vcmp.eq.s32.totalorder %v274, 1
        %vm285 = vcmp.eq.s32.totalorder %v275, 1
        %vm286 = vcmp.eq.s32.totalorder %v276, 1
        %vm287 = vcmp.eq.s32.totalorder %v277, 1
        %vm288 = vcmp.eq.s32.totalorder %v278, 1
        %vm289 = vcmp.eq.s32.totalorder %v279, 1
        %vm290 = vcmp.eq.s32.totalorder %v280, 1
        %vm291 = vcmp.eq.s32.totalorder %v281, 1
        %vm292 = vcmp.eq.s32.totalorder %v282, 1
        %v293 = vsel %vm179, 1, 0
        %v294 = vsel %vm180, 1, 0
        %vm295 = vcmp.eq.s32.totalorder %v293, 1
        %vm296 = vcmp.eq.s32.totalorder %v294, 1
        %vm297 = vmor %vm283, %vm295
        %vm298 = vmor %vm283, %vm296
        %vm299 = vmor %vm284, %vm295
        %vm300 = vmor %vm284, %vm296
        %vm301 = vmor %vm285, %vm295
        %vm302 = vmor %vm285, %vm296
        %vm303 = vmor %vm286, %vm295
        %vm304 = vmor %vm286, %vm296
        %vm305 = vmor %vm287, %vm295
        %vm306 = vmor %vm287, %vm296
        %vm307 = vmor %vm288, %vm295
        %vm308 = vmor %vm288, %vm296
        %vm309 = vmor %vm289, %vm295
        %vm310 = vmor %vm289, %vm296
        %vm311 = vmor %vm290, %vm295
        %vm312 = vmor %vm290, %vm296
        %vm313 = vmor %vm291, %vm295
        %vm314 = vmor %vm291, %vm296
        %vm315 = vmor %vm292, %vm295
        %vm316 = vmor %vm292, %vm296
        %v317 = vld [vmem:[%s141] sm:$0xff]
        %v318 = vld [vmem:[%s141 + $0x8] sm:$0xff]
        %v319 = vld [vmem:[%s141 + $0x10] sm:$0xff]
        %v320 = vld [vmem:[%s141 + $0x18] sm:$0xff]
        %v321 = vld [vmem:[%s141 + $0x20] sm:$0xff]
        %v322 = vld [vmem:[%s141 + $0x28] sm:$0xff]
        %v323 = vld [vmem:[%s141 + $0x30] sm:$0xff]
        %v324 = vld [vmem:[%s141 + $0x38] sm:$0xff]
        %v325 = vld [vmem:[%s141 + $0x40] sm:$0xff]
        %v326 = vld [vmem:[%s141 + $0x48] sm:$0xff]
        %v327 = vld [vmem:[%s141 + $0x50] sm:$0xff]
        %v328 = vld [vmem:[%s141 + $0x58] sm:$0xff]
        %v329 = vld [vmem:[%s141 + $0x60] sm:$0xff]
        %v330 = vld [vmem:[%s141 + $0x68] sm:$0xff]
        %v331 = vld [vmem:[%s141 + $0x70] sm:$0xff]
        %v332 = vld [vmem:[%s141 + $0x78] sm:$0xff]
        %v333 = vld [vmem:[%s141 + $0x80] sm:$0xff]
        %v334 = vld [vmem:[%s141 + $0x88] sm:$0xff]
        %v335 = vld [vmem:[%s141 + $0x90] sm:$0xff]
        %v336 = vld [vmem:[%s141 + $0x98] sm:$0xff]
        %v337 = vsel %vm297, 0.0, %v317
        %v338 = vsel %vm298, 0.0, %v318
        %v339 = vsel %vm299, 0.0, %v319
        %v340 = vsel %vm300, 0.0, %v320
        %v341 = vsel %vm301, 0.0, %v321
        %v342 = vsel %vm302, 0.0, %v322
        %v343 = vsel %vm303, 0.0, %v323
        %v344 = vsel %vm304, 0.0, %v324
        %v345 = vsel %vm305, 0.0, %v325
        %v346 = vsel %vm306, 0.0, %v326
        %v347 = vsel %vm307, 0.0, %v327
        %v348 = vsel %vm308, 0.0, %v328
        %v349 = vsel %vm309, 0.0, %v329
        %v350 = vsel %vm310, 0.0, %v330
        %v351 = vsel %vm311, 0.0, %v331
        %v352 = vsel %vm312, 0.0, %v332
        %v353 = vsel %vm313, 0.0, %v333
        %v354 = vsel %vm314, 0.0, %v334
        %v355 = vsel %vm315, 0.0, %v335
        %v356 = vsel %vm316, 0.0, %v336
        %357 = vst [vmem:[%s159] sm:$0xff] %v337
        %358 = vst [vmem:[%s159 + $0x8] sm:$0xff] %v338
        %359 = vst [vmem:[%s159 + $0x10] sm:$0xff] %v339
        %360 = vst [vmem:[%s159 + $0x18] sm:$0xff] %v340
        %361 = vst [vmem:[%s159 + $0x20] sm:$0xff] %v341
        %362 = vst [vmem:[%s159 + $0x28] sm:$0xff] %v342
        %363 = vst [vmem:[%s159 + $0x30] sm:$0xff] %v343
        %364 = vst [vmem:[%s159 + $0x38] sm:$0xff] %v344
        %365 = vst [vmem:[%s159 + $0x40] sm:$0xff] %v345
        %366 = vst [vmem:[%s159 + $0x48] sm:$0xff] %v346
        %367 = vst [vmem:[%s159 + $0x50] sm:$0xff] %v347
        %368 = vst [vmem:[%s159 + $0x58] sm:$0xff] %v348
        %369 = vst [vmem:[%s159 + $0x60] sm:$0xff] %v349
        %370 = vst [vmem:[%s159 + $0x68] sm:$0xff] %v350
        %371 = vst [vmem:[%s159 + $0x70] sm:$0xff] %v351
        %372 = vst [vmem:[%s159 + $0x78] sm:$0xff] %v352
        %373 = vst [vmem:[%s159 + $0x80] sm:$0xff] %v353
        %374 = vst [vmem:[%s159 + $0x88] sm:$0xff] %v354
        %375 = vst [vmem:[%s159 + $0x90] sm:$0xff] %v355
        %376 = vst [vmem:[%s159 + $0x98] sm:$0xff] %v356
        %s377 = sand.u32 %s75, 1
        %s378 = scalar_lea.sflag [#allocation6], %s377
        %s379 = sand.u32 %s75, 1
        %s380 = smul.addr %s379, 160
        %s381 = scalar_lea.vmem [#allocation7], %s380
        // Predicated region
        $region29: #{tpu_custom_call.1} parent=23 // pred_check
          %p382 = pneg %p85
        $region30: #{tpu_custom_call.1} parent=23 // pred_check_branch
          %384 = sbr.rel (%p382) target = $region32
        $region31: #{tpu_custom_call.1} parent=23 // pred_region
          %s385 = smul.u32 2, %s30
          %s387 = ssub.s32 2560, 2560
          %388 = vsyncadd %s378, %s387
          %s389 = smul.addr %s29, 20
          %s390 = sadd.s32 %s385, %s389
          %s391 = smul.addr %s390, 128
          %s392 = scalar_lea.hbm %s2, %s391
          %s393 = sshll.u32 %s381, 4
          %s394 = int_to_ptr.vmem [resolvable:$true] %s393
          %399 = dma.vmem_to_hbm [thread:$0]  %s394, 2560, %s392, %s378, 256, 256, 16
        $region32: #{tpu_custom_call.1} parent=23 // pred_fallthru
          _
      $region24: #{tpu_custom_call.1} parent=5 // pred_fallthru
        _
      %p400 = scmp.le.s32.totalorder 2, %s20
      // Predicated region
      $region33: #{tpu_custom_call.1} parent=5 // pred_check
        %p401 = pneg %p400
      $region34: #{tpu_custom_call.1} parent=5 // pred_check_branch
        %403 = sbr.rel (%p401) target = $region36
      $region35: #{tpu_custom_call.1} parent=5 // pred_region
        %s404 = ssub.s32 %s20, 2
        // Predicated region
        $region37: #{tpu_custom_call.1} parent=35 // pred_check
          %p405 = pneg %p91
        $region38: #{tpu_custom_call.1} parent=35 // pred_check_branch
          %407 = sbr.rel (%p405) target = $region40
        $region39: #{tpu_custom_call.1} parent=35 // pred_region
          %s408 = sand.u32 %s76, 1
          %s409 = scalar_lea.sflag [#allocation6], %s408
          %s410 = sand.u32 %s76, 1
          %s411 = smul.addr %s410, 160
          %s412 = scalar_lea.vmem [#allocation7], %s411
          %413 = dma.done %s409, 2560
        $region40: #{tpu_custom_call.1} parent=35 // pred_fallthru
          _
      $region36: #{tpu_custom_call.1} parent=5 // pred_fallthru
        _
    $region6: #{tpu_custom_call.1} parent=1 // loop_footer
      %s24 = sadd.s32 1, %s20
    $region7: #{tpu_custom_call.1} parent=1 // loop_footer_branch
      %19 = sbr.rel target = $region3
    $region8: #{tpu_custom_call.1} parent=1 // loop_exit
      _
    %414 = vsyncpa [#allocation5], 1
    %s415 = scalar_lea.sflag [#allocation5], 1
    %416 = vsyncpa %s415, 1
    %417 = vsyncpa [#allocation6], 1
    %s418 = scalar_lea.sflag [#allocation6], 1
    %419 = vsyncpa %s418, 1

</llo_original>
